<compile_context>
chip_gen: v6e
topology: v6e:2x2x1
jax: 0.10.0
libtpu: 0.0.40
codegen_flags: <defaults>
</compile_context>

<pallas_src>
import jax
import jax.numpy as jnp
from jax.experimental import pallas as pl
from jax.experimental.pallas import tpu as pltpu

_SQRT_2_OVER_PI = 0.7978845608028654
_GELU_K = 0.044715


def _gelu_tanh(y):
    return 0.5 * y * (1.0 + jnp.tanh(_SQRT_2_OVER_PI * (y + _GELU_K * (y * y * y))))


def convt1x1_gelu_kernel(x_ref, wt_ref, b_ref, o_ref):
    # x_ref : (Nb, Cin, THW)  f32, lane-dense     (VMEM)
    # wt_ref: (Cout, Cin)     tiny weight tile    (VMEM)
    # b_ref : (Cout, 1)       bias column         (VMEM)
    # o_ref : (Nb, Cout, THW)                      (VMEM)
    nb, cin, _ = x_ref.shape

    # Hoisted once per grid step.
    wt = wt_ref[...]          # (Cout, Cin)
    b = b_ref[...]            # (Cout, 1)

    for n in range(nb):       # small static unroll (Nb is chosen tiny)
        x = x_ref[n]          # (Cin, THW)
        # Vectorized over all Cout sublanes at once:
        #   acc[o, p] = b[o] + sum_i wt[o, i] * x[i, p]
        acc = b + wt[:, 0:1] * x[0:1, :]
        for i in range(1, cin):
            acc = acc + wt[:, i:i + 1] * x[i:i + 1, :]
        # tanh-approx GELU (EUP), single pass on the full (Cout, THW) tile.
        o_ref[n] = _gelu_tanh(acc).astype(o_ref.dtype)


def _pick_tiles(n_batch, hw_pad, per_hw_bytes):
    """Choose (Nb, THW): enough bytes per grid step to amortize pipeline
    overhead, >=2 parallel grid steps when possible (v7x: 2 TensorCores),
    and block sizes far under the scoped-VMEM limit (v7x: 32 MiB)."""
    TARGET_STEP_BYTES = 512 * 1024
    BLOCK_VMEM_CAP = 4 * 1024 * 1024

    per_img_bytes = per_hw_bytes * hw_pad
    cap_nb = max(1, TARGET_STEP_BYTES // max(per_img_bytes, 1))
    if n_batch >= 2:
        cap_nb = max(1, min(cap_nb, n_batch // 2))  # keep >=2 batch steps
    nb = 1
    for d in range(1, n_batch + 1):
        if n_batch % d == 0 and d <= cap_nb:
            nb = d

    hw_cap = max(128, (BLOCK_VMEM_CAP // max(per_hw_bytes * nb, 1)) // 128 * 128)
    need_split = (n_batch // nb) < 2 and hw_pad >= 256
    thw = 128
    m = hw_pad // 128
    for d in range(1, m + 1):
        if m % d == 0:
            t = 128 * d
            if t <= hw_cap and (not need_split or t <= hw_pad // 2):
                thw = t
    return nb, thw


def conv_transpose_1x1_gelu(x_nchw, weight, bias):
    """x_nchw: (N, Cin, H, W); weight: (Cin, Cout, 1, 1); bias: (Cout,)."""
    N, Cin, H, W = x_nchw.shape
    Cout = weight.shape[1]
    HW = H * W

    # NCHW memory layout already is (N, C, H*W): zero-cost reshape.
    x3d = x_nchw.reshape(N, Cin, HW)

    # Lane-dense last dim: pad H*W up to a multiple of 128 if needed.
    HW_pad = ((HW + 127) // 128) * 128
    if HW_pad != HW:
        x3d = jnp.pad(x3d, ((0, 0), (0, 0), (0, HW_pad - HW)))

    wT = weight.reshape(Cin, Cout).T          # (Cout, Cin), tiny
    b2d = bias.reshape(Cout, 1)               # (Cout, 1)

    itemsize = jnp.dtype(x_nchw.dtype).itemsize
    Nb, THW = _pick_tiles(N, HW_pad, (Cin + Cout) * itemsize)
    grid = (N // Nb, HW_pad // THW)

    out3d = pl.pallas_call(
        convt1x1_gelu_kernel,
        out_shape=jax.ShapeDtypeStruct((N, Cout, HW_pad), x_nchw.dtype),
        grid=grid,
        in_specs=[
            pl.BlockSpec((Nb, Cin, THW), lambda n, s: (n, 0, s)),
            pl.BlockSpec((Cout, Cin), lambda n, s: (0, 0)),   # weight (VMEM)
            pl.BlockSpec((Cout, 1), lambda n, s: (0, 0)),     # bias   (VMEM)
        ],
        out_specs=pl.BlockSpec((Nb, Cout, THW), lambda n, s: (n, 0, s)),
        compiler_params=pltpu.CompilerParams(
            dimension_semantics=("parallel", "parallel")
        ),
    )(x3d, wT, b2d)

    if HW_pad != HW:
        out3d = out3d[:, :, :HW]
    return out3d.reshape(N, Cout, H, W)


def _reference(x, weight, bias):
    Cin, Cout = weight.shape[0], weight.shape[1]
    w2d = weight.reshape(Cin, Cout)
    lin = jnp.einsum(
        "nihw,io->nohw", x, w2d, precision=jax.lax.Precision.HIGHEST
    ) + bias.reshape(1, Cout, 1, 1)
    return _gelu_tanh(lin)


if __name__ == "__main__":
    key = jax.random.PRNGKey(0)
    kx, kw, kb = jax.random.split(key, 3)

    # Shapes consistent with the module: Cin=3 -> Cout=8, 32x32 spatial;
    # batch=2 exercises the per-batch-group grid path.
    N, Cin, H, W, Cout = 2, 3, 32, 32, 8

    x = jax.random.normal(kx, (N, Cin, H, W), dtype=jnp.float32)

    # ConvTranspose2d weight layout: (Cin, Cout, 1, 1)
    fan_in = Cin
    bound = 1.0 / (fan_in ** 0.5)
    weight = jax.random.uniform(
        kw, (Cin, Cout, 1, 1), jnp.float32, minval=-bound, maxval=bound
    )
    bias = jax.random.uniform(
        kb, (Cout,), jnp.float32, minval=-bound, maxval=bound
    )

    out = conv_transpose_1x1_gelu(x, weight, bias)
    jax.block_until_ready(out)
    assert out.shape == (N, Cout, H, W), out.shape

    ref = _reference(x, weight, bias)
    err = float(jnp.max(jnp.abs(out - ref)))
    assert err < 1e-5, err

    # Second case: batch=1 (the module's own batch) exercises the HW-chunk
    # grid axis (>=2 parallel steps for v7x); 20x20 exercises lane padding.
    x1 = jax.random.normal(kx, (1, Cin, 20, 20), dtype=jnp.float32)
    out1 = conv_transpose_1x1_gelu(x1, weight, bias)
    jax.block_until_ready(out1)
    assert out1.shape == (1, Cout, 20, 20), out1.shape
    ref1 = _reference(x1, weight, bias)
    err1 = float(jnp.max(jnp.abs(out1 - ref1)))
    assert err1 < 1e-5, err1

    print("KERNEL_OK")
</pallas_src>

<mosaic_0001>
module attributes {stable_mosaic.version = 11 : i64} {
  func.func @convt1x1_gelu_kernel(%arg0: i32, %arg1: i32, %arg2: memref<1x3x1024xf32, #tpu.memory_space<vmem>>, %arg3: memref<8x3xf32, #tpu.memory_space<vmem>>, %arg4: memref<8x1xf32, #tpu.memory_space<vmem>>, %arg5: memref<1x8x1024xf32, #tpu.memory_space<vmem>>) attributes {dimension_semantics = [#tpu.dimension_semantics<parallel>, #tpu.dimension_semantics<parallel>], iteration_bounds = array<i64: 2, 1>, scalar_prefetch = 0 : i64, scratch_operands = 0 : i64, tpu.core_type = #tpu.core_type<tc>, window_params = [{transform_indices = @transform_0, window_bounds = array<i64: 1, 3, 1024>}, {pipeline_mode = #tpu.pipeline_mode<synchronous>, transform_indices = @transform_1, window_bounds = array<i64: 8, 3>}, {pipeline_mode = #tpu.pipeline_mode<synchronous>, transform_indices = @transform_2, window_bounds = array<i64: 8, 1>}, {transform_indices = @transform_3, window_bounds = array<i64: 1, 8, 1024>}]} {
    %c0 = arith.constant 0 : index
    %c0_0 = arith.constant 0 : index
    %0 = vector.load %arg3[%c0, %c0_0] : memref<8x3xf32, #tpu.memory_space<vmem>>, vector<8x3xf32>
    %c0_1 = arith.constant 0 : index
    %c0_2 = arith.constant 0 : index
    %1 = vector.load %arg4[%c0_1, %c0_2] : memref<8x1xf32, #tpu.memory_space<vmem>>, vector<8x1xf32>
    %c0_3 = arith.constant 0 : index
    %c0_4 = arith.constant 0 : index
    %c0_5 = arith.constant 0 : index
    %2 = vector.load %arg2[%c0_3, %c0_4, %c0_5] : memref<1x3x1024xf32, #tpu.memory_space<vmem>>, vector<1x3x1024xf32>
    %3 = vector.shape_cast %2 : vector<1x3x1024xf32> to vector<3x1024xf32>
    %4 = vector.extract_strided_slice %0 {offsets = [0, 0], sizes = [8, 1], strides = [1, 1]} : vector<8x3xf32> to vector<8x1xf32>
    %5 = vector.extract_strided_slice %3 {offsets = [0, 0], sizes = [1, 1024], strides = [1, 1]} : vector<3x1024xf32> to vector<1x1024xf32>
    %6 = vector.broadcast %4 : vector<8x1xf32> to vector<8x1024xf32>
    %7 = vector.broadcast %5 : vector<1x1024xf32> to vector<8x1024xf32>
    %8 = arith.mulf %6, %7 : vector<8x1024xf32>
    %9 = vector.broadcast %1 : vector<8x1xf32> to vector<8x1024xf32>
    %10 = arith.addf %9, %8 : vector<8x1024xf32>
    %11 = vector.extract_strided_slice %0 {offsets = [0, 1], sizes = [8, 1], strides = [1, 1]} : vector<8x3xf32> to vector<8x1xf32>
    %12 = vector.extract_strided_slice %3 {offsets = [1, 0], sizes = [1, 1024], strides = [1, 1]} : vector<3x1024xf32> to vector<1x1024xf32>
    %13 = vector.broadcast %11 : vector<8x1xf32> to vector<8x1024xf32>
    %14 = vector.broadcast %12 : vector<1x1024xf32> to vector<8x1024xf32>
    %15 = arith.mulf %13, %14 : vector<8x1024xf32>
    %16 = arith.addf %10, %15 : vector<8x1024xf32>
    %17 = vector.extract_strided_slice %0 {offsets = [0, 2], sizes = [8, 1], strides = [1, 1]} : vector<8x3xf32> to vector<8x1xf32>
    %18 = vector.extract_strided_slice %3 {offsets = [2, 0], sizes = [1, 1024], strides = [1, 1]} : vector<3x1024xf32> to vector<1x1024xf32>
    %19 = vector.broadcast %17 : vector<8x1xf32> to vector<8x1024xf32>
    %20 = vector.broadcast %18 : vector<1x1024xf32> to vector<8x1024xf32>
    %21 = arith.mulf %19, %20 : vector<8x1024xf32>
    %22 = arith.addf %16, %21 : vector<8x1024xf32>
    %cst = arith.constant 5.000000e-01 : f32
    %23 = vector.broadcast %cst : f32 to vector<8x1024xf32>
    %24 = arith.mulf %23, %22 : vector<8x1024xf32>
    %25 = arith.mulf %22, %22 : vector<8x1024xf32>
    %26 = arith.mulf %25, %22 : vector<8x1024xf32>
    %cst_6 = arith.constant 4.471500e-02 : f32
    %27 = vector.broadcast %cst_6 : f32 to vector<8x1024xf32>
    %28 = arith.mulf %27, %26 : vector<8x1024xf32>
    %29 = arith.addf %22, %28 : vector<8x1024xf32>
    %cst_7 = arith.constant 0.797884583 : f32
    %30 = vector.broadcast %cst_7 : f32 to vector<8x1024xf32>
    %31 = arith.mulf %30, %29 : vector<8x1024xf32>
    %32 = math.tanh %31 : vector<8x1024xf32>
    %cst_8 = arith.constant 1.000000e+00 : f32
    %33 = vector.broadcast %cst_8 : f32 to vector<8x1024xf32>
    %34 = arith.addf %33, %32 : vector<8x1024xf32>
    %35 = arith.mulf %24, %34 : vector<8x1024xf32>
    %c0_9 = arith.constant 0 : index
    %c0_10 = arith.constant 0 : index
    %c0_11 = arith.constant 0 : index
    %36 = vector.load %arg5[%c0_9, %c0_10, %c0_11] : memref<1x8x1024xf32, #tpu.memory_space<vmem>>, vector<1x8x1024xf32>
    %37 = vector.shape_cast %36 : vector<1x8x1024xf32> to vector<8x1024xf32>
    %38 = vector.shape_cast %35 : vector<8x1024xf32> to vector<1x8x1024xf32>
    tpu.vector_store %arg5[%c0_9, %c0_10, %c0_11], %38 {strides = array<i32>} : memref<1x8x1024xf32, #tpu.memory_space<vmem>>, vector<1x8x1024xf32>,
    return
  }
  func.func @transform_0(%arg0: i32, %arg1: i32) -> (i32, i32, i32) {
    %c0_i32 = arith.constant 0 : i32
    %c0_i32_0 = arith.constant 0 : i32
    return %arg0, %c0_i32, %arg1 : i32, i32, i32
  }
  func.func @transform_1(%arg0: i32, %arg1: i32) -> (i32, i32) {
    %c0_i32 = arith.constant 0 : i32
    %c0_i32_0 = arith.constant 0 : i32
    %c0_i32_1 = arith.constant 0 : i32
    return %c0_i32, %c0_i32_0 : i32, i32
  }
  func.func @transform_2(%arg0: i32, %arg1: i32) -> (i32, i32) {
    %c0_i32 = arith.constant 0 : i32
    %c0_i32_0 = arith.constant 0 : i32
    %c0_i32_1 = arith.constant 0 : i32
    return %c0_i32, %c0_i32_0 : i32, i32
  }
  func.func @transform_3(%arg0: i32, %arg1: i32) -> (i32, i32, i32) {
    %c0_i32 = arith.constant 0 : i32
    %c0_i32_0 = arith.constant 0 : i32
    return %arg0, %c0_i32, %arg1 : i32, i32, i32
  }
}

</mosaic_0001>

<llo_original>
// kernel: tpu_custom_call.1
$region0: #{tpu_custom_call.1}
  #allocation0 [shape = 'u32[]', space=smem, size = 0x4, offset = 0x4, fixed_abs, tag = 'smem constant byte address 0x4 - core index']
  #allocation1 [shape = 'u32[144,128]{1,0:T(1,128)}', space=vmem, size = 0x12000, scoped, tag = 'internal scratch']
  %s0 = inlined_call_operand.vmem [shape: f32[2,3,1024], index: 0, kind: input, shape index: {}]
  %s1 = inlined_call_operand.vmem [shape: f32[8,3], index: 1, kind: input, shape index: {}]
  %s2 = inlined_call_operand.vmem [shape: f32[8,1], index: 2, kind: input, shape index: {}]
  %s3 = inlined_call_operand.hbm [shape: f32[2,8,1024], index: 3, kind: output, shape index: {}]
  %s4 = sld [smem:[#allocation0]]
  $region45: #{tpu_custom_call.1} parent=0
    _
  %s6 = ssub.s32 1, %s4
  %s7 = scalar_select 0, %s6, %s4
  $region1: #{tpu_custom_call.1} parent=0
    #allocation2 [shape = 'u8[65536]{0}', space=vmem, size = 0x10000, scoped, tag = 'output window, operand 0']
    #allocation3 [shape = 's32[2]{0}', space=sflag, size = 0x8, scoped, tag = 'scoped memory for tpu_custom_call.1']
    %8 = vsyncpa [#allocation3], 0
    %s9 = scalar_lea.sflag [#allocation3], 1
    %10 = vsyncpa %s9, 0
    loop: start=0, step=1, limit=4
    $region2: #{tpu_custom_call.1} parent=1 // loop_pre_header
      _
    $region3: #{tpu_custom_call.1} parent=1 // loop_header
      %s12 = sphi 0, %s16
      %p13 = scmp.ge.s32.totalorder %s12, 4
      %s19 = sphi 0, %s31
      %s20 = sphi 0, %s27
      %s21 = sphi 0, %s19
      %s22 = sphi 0, %s20
      %s23 = sphi 0, %s21
      %s24 = sphi 0, %s22
      %s36 = sphi 0, %s38
      %s39 = sphi 0, %s36
      %s40 = sphi 0, %s39
      %s56 = sphi 0, %s40
      %s60 = sphi 0, %s60
      %s62 = sphi 0, %s60
      %s63 = sphi 0, %s62
      %s77 = sphi 0, %s63
      %s81 = sphi 0, %s81
      %s83 = sphi 0, %s81
      %s84 = sphi 0, %s83
      %s98 = sphi 0, %s84
      %s106 = sphi 0, %s108
      %s109 = sphi 0, %s106
      %s110 = sphi 0, %s109
      %s126 = sphi 0, %s110
    $region4: #{tpu_custom_call.1} parent=1 // loop_header_branch
      %15 = sbr.rel (%p13) target = $region8
    $region5: #{tpu_custom_call.1} parent=1 // loop_body
      %s17 = ssub.s32 %s12, 1
      %s18 = ssub.s32 %s12, 2
      %s25 = sadd.s32 1, %s20
      %p26 = scmp.ge.s32.totalorder %s25, 1
      %s27 = scalar_select %p26, 0, %s25
      %s28 = sadd.s32 1, %s19
      %s29 = scalar_select %p26, %s28, %s19
      %p30 = scmp.ge.s32.totalorder %s29, 2
      %s31 = scalar_select %p30, 0, %s29
      %s32 = ssub.s32 %s19, %s31
      %s33 = ssub.s32 %s20, %s27
      %s34 = sor.u32 %s32, %s33
      %p35 = scmp.eq.s32.totalorder %s34, 0
      %s37 = sadd.s32 %s36, 1
      %s38 = scalar_select %p35, %s36, %s37
      %p41 = pneg %p35
      %p42 = scmp.eq.s32.totalorder %s12, 1
      %p43 = por %p41, %p42
      %p44 = scmp.ne.s32.totalorder %s36, %s39
      %p45 = scmp.eq.s32.totalorder %s12, 0
      %p46 = por %p44, %p45
      %p47 = scmp.ne.s32.totalorder %s36, %s39
      %p48 = scmp.eq.s32.totalorder %s17, 1
      %p49 = por %p47, %p48
      %p50 = scmp.ne.s32.totalorder %s39, %s40
      %p51 = scmp.eq.s32.totalorder %s17, 0
      %p52 = por %p50, %p51
      %p53 = scmp.ne.s32.totalorder %s39, %s40
      %p54 = scmp.eq.s32.totalorder %s18, 1
      %p55 = por %p53, %p54
      %p57 = scmp.ne.s32.totalorder %s40, %s56
      %p58 = scmp.eq.s32.totalorder %s18, 0
      %p59 = por %p57, %p58
      %s61 = sadd.s32 %s60, 1
      %p64 = scmp.eq.s32.totalorder %s12, 1
      %p65 = scmp.ne.s32.totalorder %s60, %s62
      %p66 = scmp.eq.s32.totalorder %s12, 0
      %p67 = por %p65, %p66
      %p68 = scmp.ne.s32.totalorder %s60, %s62
      %p69 = scmp.eq.s32.totalorder %s17, 1
      %p70 = por %p68, %p69
      %p71 = scmp.ne.s32.totalorder %s62, %s63
      %p72 = scmp.eq.s32.totalorder %s17, 0
      %p73 = por %p71, %p72
      %p74 = scmp.ne.s32.totalorder %s62, %s63
      %p75 = scmp.eq.s32.totalorder %s18, 1
      %p76 = por %p74, %p75
      %p78 = scmp.ne.s32.totalorder %s63, %s77
      %p79 = scmp.eq.s32.totalorder %s18, 0
      %p80 = por %p78, %p79
      %s82 = sadd.s32 %s81, 1
      %p85 = scmp.eq.s32.totalorder %s12, 1
      %p86 = scmp.ne.s32.totalorder %s81, %s83
      %p87 = scmp.eq.s32.totalorder %s12, 0
      %p88 = por %p86, %p87
      %p89 = scmp.ne.s32.totalorder %s81, %s83
      %p90 = scmp.eq.s32.totalorder %s17, 1
      %p91 = por %p89, %p90
      %p92 = scmp.ne.s32.totalorder %s83, %s84
      %p93 = scmp.eq.s32.totalorder %s17, 0
      %p94 = por %p92, %p93
      %p95 = scmp.ne.s32.totalorder %s83, %s84
      %p96 = scmp.eq.s32.totalorder %s18, 1
      %p97 = por %p95, %p96
      %p99 = scmp.ne.s32.totalorder %s84, %s98
      %p100 = scmp.eq.s32.totalorder %s18, 0
      %p101 = por %p99, %p100
      %s102 = ssub.s32 %s19, %s31
      %s103 = ssub.s32 %s20, %s27
      %s104 = sor.u32 %s102, %s103
      %p105 = scmp.eq.s32.totalorder %s104, 0
      %s107 = sadd.s32 %s106, 1
      %s108 = scalar_select %p105, %s106, %s107
      %p111 = pneg %p105
      %p112 = scmp.eq.s32.totalorder %s12, 1
      %p113 = por %p111, %p112
      %p114 = scmp.ne.s32.totalorder %s106, %s109
      %p115 = scmp.eq.s32.totalorder %s12, 0
      %p116 = por %p114, %p115
      %p117 = scmp.ne.s32.totalorder %s106, %s109
      %p118 = scmp.eq.s32.totalorder %s17, 1
      %p119 = por %p117, %p118
      %p120 = scmp.ne.s32.totalorder %s109, %s110
      %p121 = scmp.eq.s32.totalorder %s17, 0
      %p122 = por %p120, %p121
      %p123 = scmp.ne.s32.totalorder %s109, %s110
      %p124 = scmp.eq.s32.totalorder %s18, 1
      %p125 = por %p123, %p124
      %p127 = scmp.ne.s32.totalorder %s110, %s126
      %p128 = scmp.eq.s32.totalorder %s18, 0
      %p129 = por %p127, %p128
      %p130 = scmp.le.s32.totalorder 1, %s12
      %p131 = scmp.lt.s32.totalorder %s12, 3
      %p132 = pnand %p130, %p131
      %p133 = pneg %p132
      // Predicated region
      $region9: #{tpu_custom_call.1} parent=5 // pred_check
        _
      $region10: #{tpu_custom_call.1} parent=5 // pred_check_branch
        %135 = sbr.rel (%p132) target = $region12
      $region11: #{tpu_custom_call.1} parent=5 // pred_region
        %s136 = ssub.s32 %s12, 1
        // Predicated region
        $region13: #{tpu_custom_call.1} parent=11 // pred_check
          %p137 = pneg %p73
        $region14: #{tpu_custom_call.1} parent=11 // pred_check_branch
          %139 = sbr.rel (%p137) target = $region16
        $region15: #{tpu_custom_call.1} parent=11 // pred_region
          _
        $region16: #{tpu_custom_call.1} parent=11 // pred_fallthru
          _
        // Predicated region
        $region17: #{tpu_custom_call.1} parent=11 // pred_check
          %p140 = pneg %p94
        $region18: #{tpu_custom_call.1} parent=11 // pred_check_branch
          %142 = sbr.rel (%p140) target = $region20
        $region19: #{tpu_custom_call.1} parent=11 // pred_region
          _
        $region20: #{tpu_custom_call.1} parent=11 // pred_fallthru
          _
      $region12: #{tpu_custom_call.1} parent=5 // pred_fallthru
        _
      %p143 = scmp.lt.s32.totalorder %s12, 2
      // Predicated region
      $region21: #{tpu_custom_call.1} parent=5 // pred_check
        %p144 = pneg %p143
      $region22: #{tpu_custom_call.1} parent=5 // pred_check_branch
        %146 = sbr.rel (%p144) target = $region24
      $region23: #{tpu_custom_call.1} parent=5 // pred_region
        // Predicated region
        $region25: #{tpu_custom_call.1} parent=23 // pred_check
          %p147 = pneg %p46
        $region26: #{tpu_custom_call.1} parent=23 // pred_check_branch
          %149 = sbr.rel (%p147) target = $region28
        $region27: #{tpu_custom_call.1} parent=23 // pred_region
          %s150 = smul.u32 8, %s20
          %p151 = scmp.lt.s32.totalorder %s19, 1
          %s152 = scalar_select %p151, %s19, 1
          %p153 = scmp.lt.s32.totalorder %s150, 7
          %s154 = scalar_select %p153, %s150, 7
          %s155 = smul.addr %s152, 8
          %s156 = sadd.s32 %s154, %s155
          %s157 = smul.addr %s156, 4
          %s158 = scalar_lea.vmem %s0, %s157
          %s159 = smul.u32 8, %s20
        $region28: #{tpu_custom_call.1} parent=23 // pred_fallthru
          _
      $region24: #{tpu_custom_call.1} parent=5 // pred_fallthru
        _
      %p160 = scmp.le.s32.totalorder 1, %s12
      %p161 = scmp.lt.s32.totalorder %s12, 3
      %p162 = pnand %p160, %p161
      %p163 = pneg %p162
      // Predicated region
      $region29: #{tpu_custom_call.1} parent=5 // pred_check
        _
      $region30: #{tpu_custom_call.1} parent=5 // pred_check_branch
        %165 = sbr.rel (%p162) target = $region32
      $region31: #{tpu_custom_call.1} parent=5 // pred_region
        %s166 = ssub.s32 %s12, 1
        %s167 = smul.u32 8, %s22
        %p168 = scmp.lt.s32.totalorder %s21, 1
        %s169 = scalar_select %p168, %s21, 1
        %p170 = scmp.lt.s32.totalorder %s167, 7
        %s171 = scalar_select %p170, %s167, 7
        %s172 = smul.addr %s169, 8
        %s173 = sadd.s32 %s171, %s172
        %s174 = smul.addr %s173, 4
        %s175 = scalar_lea.vmem %s0, %s174
        %p176 = pneg %p52
        %p177 = pneg %p49
        %p178 = pneg %p73
        %p179 = pneg %p70
        %p180 = pneg %p94
        %p181 = pneg %p91
        %p182 = pneg %p122
        %p183 = pneg %p119
        %s184 = sand.u32 %s109, 1
        %s185 = scalar_lea.sflag [#allocation3], %s184
        %s186 = sand.u32 %s109, 1
        %s187 = smul.addr %s186, 64
        %s188 = scalar_lea.vmem [#allocation2], %s187
        %s189 = smul.u32 8, %s22
        %p190 = scmp.lt.s32.totalorder %s21, 1
        %s191 = scalar_select %p190, %s21, 1
        %p192 = scmp.lt.s32.totalorder %s189, 7
        %s193 = scalar_select %p192, %s189, 7
        %s194 = smul.addr %s191, 8
        %s195 = sadd.s32 %s193, %s194
        %s196 = smul.addr %s195, 4
        %s197 = scalar_lea.vmem %s0, %s196
        %s198 = smul.u32 8, %s22
        %s199 = smul.u32 8, %s22
        %v200 = vld [vmem:[%s1] sm:$0xff]
        %v201 = vld [vmem:[%s2] sm:$0xff]
        %v202 = vld [vmem:[%s197] sm:$0x77]
        %v203 = vld [vmem:[%s197 + $0x8] sm:$0x77]
        %v204 = vld [vmem:[%s197 + $0x10] sm:$0x77]
        %v205 = vld [vmem:[%s197 + $0x18] sm:$0x77]
        %207 = vset.pattern.permute.xlu0 0
        %208 = vperm.xlu0 %207, %v200
        %v209 = vpop.permute.xlu0 %208
        %v215 = vlaneseq
        %v216 = vshrl.u32 %v215, 7
        %v217 = vsub.s32 0, %v216
        %v218 = vrot.slane %v202, %v217
        %v219 = vlaneseq
        %v220 = vshrl.u32 %v219, 7
        %v221 = vsub.s32 4, %v220
        %v222 = vrot.slane %v202, %v221
        %v223 = vlaneseq
        %v224 = vshrl.u32 %v223, 7
        %v225 = vsub.s32 0, %v224
        %v226 = vrot.slane %v203, %v225
        %v227 = vlaneseq
        %v228 = vshrl.u32 %v227, 7
        %v229 = vsub.s32 4, %v228
        %v230 = vrot.slane %v203, %v229
        %v231 = vlaneseq
        %v232 = vshrl.u32 %v231, 7
        %v233 = vsub.s32 0, %v232
        %v234 = vrot.slane %v204, %v233
        %v235 = vlaneseq
        %v236 = vshrl.u32 %v235, 7
        %v237 = vsub.s32 4, %v236
        %v238 = vrot.slane %v204, %v237
        %v239 = vlaneseq
        %v240 = vshrl.u32 %v239, 7
        %v241 = vsub.s32 0, %v240
        %v242 = vrot.slane %v205, %v241
        %v243 = vlaneseq
        %v244 = vshrl.u32 %v243, 7
        %v245 = vsub.s32 4, %v244
        %v246 = vrot.slane %v205, %v245
        %v255 = vlaneseq
        %v256 = vshrl.u32 %v255, 7
        %v257 = vsub.s32 0, %v256
        %v258 = vrot.slane %v218, %v257
        %v259 = vlaneseq
        %v260 = vshrl.u32 %v259, 7
        %v261 = vsub.s32 0, %v260
        %v262 = vrot.slane %v222, %v261
        %v263 = vlaneseq
        %v264 = vshrl.u32 %v263, 7
        %v265 = vsub.s32 0, %v264
        %v266 = vrot.slane %v226, %v265
        %v267 = vlaneseq
        %v268 = vshrl.u32 %v267, 7
        %v269 = vsub.s32 0, %v268
        %v270 = vrot.slane %v230, %v269
        %v271 = vlaneseq
        %v272 = vshrl.u32 %v271, 7
        %v273 = vsub.s32 0, %v272
        %v274 = vrot.slane %v234, %v273
        %v275 = vlaneseq
        %v276 = vshrl.u32 %v275, 7
        %v277 = vsub.s32 0, %v276
        %v278 = vrot.slane %v238, %v277
        %v279 = vlaneseq
        %v280 = vshrl.u32 %v279, 7
        %v281 = vsub.s32 0, %v280
        %v282 = vrot.slane %v242, %v281
        %v283 = vlaneseq
        %v284 = vshrl.u32 %v283, 7
        %v285 = vsub.s32 0, %v284
        %v286 = vrot.slane %v246, %v285
        %v287 = vmul.f32 %v209, %v258
        %v288 = vmul.f32 %v209, %v262
        %v289 = vmul.f32 %v209, %v266
        %v290 = vmul.f32 %v209, %v270
        %v291 = vmul.f32 %v209, %v274
        %v292 = vmul.f32 %v209, %v278
        %v293 = vmul.f32 %v209, %v282
        %v294 = vmul.f32 %v209, %v286
        %296 = vset.pattern.permute.xlu0 0
        %297 = vperm.xlu0 %296, %v201
        %v298 = vpop.permute.xlu0 %297
        %v300 = vadd.f32 %v298, %v287
        %v301 = vadd.f32 %v298, %v288
        %v302 = vadd.f32 %v298, %v289
        %v303 = vadd.f32 %v298, %v290
        %v304 = vadd.f32 %v298, %v291
        %v305 = vadd.f32 %v298, %v292
        %v306 = vadd.f32 %v298, %v293
        %v307 = vadd.f32 %v298, %v294
        %308 = vset.pattern.permute.xlu0 1
        %309 = vperm.xlu0 %308, %v200
        %v310 = vpop.permute.xlu0 %309
        %v312 = vlaneseq
        %v313 = vshrl.u32 %v312, 7
        %v314 = vsub.s32 1, %v313
        %v315 = vrot.slane %v202, %v314
        %v316 = vlaneseq
        %v317 = vshrl.u32 %v316, 7
        %v318 = vsub.s32 5, %v317
        %v319 = vrot.slane %v202, %v318
        %v320 = vlaneseq
        %v321 = vshrl.u32 %v320, 7
        %v322 = vsub.s32 1, %v321
        %v323 = vrot.slane %v203, %v322
        %v324 = vlaneseq
        %v325 = vshrl.u32 %v324, 7
        %v326 = vsub.s32 5, %v325
        %v327 = vrot.slane %v203, %v326
        %v328 = vlaneseq
        %v329 = vshrl.u32 %v328, 7
        %v330 = vsub.s32 1, %v329
        %v331 = vrot.slane %v204, %v330
        %v332 = vlaneseq
        %v333 = vshrl.u32 %v332, 7
        %v334 = vsub.s32 5, %v333
        %v335 = vrot.slane %v204, %v334
        %v336 = vlaneseq
        %v337 = vshrl.u32 %v336, 7
        %v338 = vsub.s32 1, %v337
        %v339 = vrot.slane %v205, %v338
        %v340 = vlaneseq
        %v341 = vshrl.u32 %v340, 7
        %v342 = vsub.s32 5, %v341
        %v343 = vrot.slane %v205, %v342
        %v352 = vlaneseq
        %v353 = vshrl.u32 %v352, 7
        %v354 = vsub.s32 1, %v353
        %v355 = vrot.slane %v315, %v354
        %v356 = vlaneseq
        %v357 = vshrl.u32 %v356, 7
        %v358 = vsub.s32 1, %v357
        %v359 = vrot.slane %v319, %v358
        %v360 = vlaneseq
        %v361 = vshrl.u32 %v360, 7
        %v362 = vsub.s32 1, %v361
        %v363 = vrot.slane %v323, %v362
        %v364 = vlaneseq
        %v365 = vshrl.u32 %v364, 7
        %v366 = vsub.s32 1, %v365
        %v367 = vrot.slane %v327, %v366
        %v368 = vlaneseq
        %v369 = vshrl.u32 %v368, 7
        %v370 = vsub.s32 1, %v369
        %v371 = vrot.slane %v331, %v370
        %v372 = vlaneseq
        %v373 = vshrl.u32 %v372, 7
        %v374 = vsub.s32 1, %v373
        %v375 = vrot.slane %v335, %v374
        %v376 = vlaneseq
        %v377 = vshrl.u32 %v376, 7
        %v378 = vsub.s32 1, %v377
        %v379 = vrot.slane %v339, %v378
        %v380 = vlaneseq
        %v381 = vshrl.u32 %v380, 7
        %v382 = vsub.s32 1, %v381
        %v383 = vrot.slane %v343, %v382
        %v384 = vmul.f32 %v310, %v355
        %v385 = vmul.f32 %v310, %v359
        %v386 = vmul.f32 %v310, %v363
        %v387 = vmul.f32 %v310, %v367
        %v388 = vmul.f32 %v310, %v371
        %v389 = vmul.f32 %v310, %v375
        %v390 = vmul.f32 %v310, %v379
        %v391 = vmul.f32 %v310, %v383
        %v392 = vadd.f32 %v300, %v384
        %v393 = vadd.f32 %v301, %v385
        %v394 = vadd.f32 %v302, %v386
        %v395 = vadd.f32 %v303, %v387
        %v396 = vadd.f32 %v304, %v388
        %v397 = vadd.f32 %v305, %v389
        %v398 = vadd.f32 %v306, %v390
        %v399 = vadd.f32 %v307, %v391
        %400 = vset.pattern.permute.xlu0 2
        %401 = vperm.xlu0 %400, %v200
        %v402 = vpop.permute.xlu0 %401
        %v404 = vlaneseq
        %v405 = vshrl.u32 %v404, 7
        %v406 = vsub.s32 2, %v405
        %v407 = vrot.slane %v202, %v406
        %v408 = vlaneseq
        %v409 = vshrl.u32 %v408, 7
        %v410 = vsub.s32 6, %v409
        %v411 = vrot.slane %v202, %v410
        %v412 = vlaneseq
        %v413 = vshrl.u32 %v412, 7
        %v414 = vsub.s32 2, %v413
        %v415 = vrot.slane %v203, %v414
        %v416 = vlaneseq
        %v417 = vshrl.u32 %v416, 7
        %v418 = vsub.s32 6, %v417
        %v419 = vrot.slane %v203, %v418
        %v420 = vlaneseq
        %v421 = vshrl.u32 %v420, 7
        %v422 = vsub.s32 2, %v421
        %v423 = vrot.slane %v204, %v422
        %v424 = vlaneseq
        %v425 = vshrl.u32 %v424, 7
        %v426 = vsub.s32 6, %v425
        %v427 = vrot.slane %v204, %v426
        %v428 = vlaneseq
        %v429 = vshrl.u32 %v428, 7
        %v430 = vsub.s32 2, %v429
        %v431 = vrot.slane %v205, %v430
        %v432 = vlaneseq
        %v433 = vshrl.u32 %v432, 7
        %v434 = vsub.s32 6, %v433
        %v435 = vrot.slane %v205, %v434
        %v444 = vlaneseq
        %v445 = vshrl.u32 %v444, 7
        %v446 = vsub.s32 2, %v445
        %v447 = vrot.slane %v407, %v446
        %v448 = vlaneseq
        %v449 = vshrl.u32 %v448, 7
        %v450 = vsub.s32 2, %v449
        %v451 = vrot.slane %v411, %v450
        %v452 = vlaneseq
        %v453 = vshrl.u32 %v452, 7
        %v454 = vsub.s32 2, %v453
        %v455 = vrot.slane %v415, %v454
        %v456 = vlaneseq
        %v457 = vshrl.u32 %v456, 7
        %v458 = vsub.s32 2, %v457
        %v459 = vrot.slane %v419, %v458
        %v460 = vlaneseq
        %v461 = vshrl.u32 %v460, 7
        %v462 = vsub.s32 2, %v461
        %v463 = vrot.slane %v423, %v462
        %v464 = vlaneseq
        %v465 = vshrl.u32 %v464, 7
        %v466 = vsub.s32 2, %v465
        %v467 = vrot.slane %v427, %v466
        %v468 = vlaneseq
        %v469 = vshrl.u32 %v468, 7
        %v470 = vsub.s32 2, %v469
        %v471 = vrot.slane %v431, %v470
        %v472 = vlaneseq
        %v473 = vshrl.u32 %v472, 7
        %v474 = vsub.s32 2, %v473
        %v475 = vrot.slane %v435, %v474
        %v476 = vmul.f32 %v402, %v447
        %v477 = vmul.f32 %v402, %v451
        %v478 = vmul.f32 %v402, %v455
        %v479 = vmul.f32 %v402, %v459
        %v480 = vmul.f32 %v402, %v463
        %v481 = vmul.f32 %v402, %v467
        %v482 = vmul.f32 %v402, %v471
        %v483 = vmul.f32 %v402, %v475
        %v484 = vadd.f32 %v392, %v476
        %v485 = vadd.f32 %v393, %v477
        %v486 = vadd.f32 %v394, %v478
        %v487 = vadd.f32 %v395, %v479
        %v488 = vadd.f32 %v396, %v480
        %v489 = vadd.f32 %v397, %v481
        %v490 = vadd.f32 %v398, %v482
        %v491 = vadd.f32 %v399, %v483
        %v492 = vmul.f32 %v484, 0.5
        %v493 = vmul.f32 %v485, 0.5
        %v494 = vmul.f32 %v486, 0.5
        %v495 = vmul.f32 %v487, 0.5
        %v496 = vmul.f32 %v488, 0.5
        %v497 = vmul.f32 %v489, 0.5
        %v498 = vmul.f32 %v490, 0.5
        %v499 = vmul.f32 %v491, 0.5
        %v500 = vmul.f32 %v484, %v484
        %v501 = vmul.f32 %v485, %v485
        %v502 = vmul.f32 %v486, %v486
        %v503 = vmul.f32 %v487, %v487
        %v504 = vmul.f32 %v488, %v488
        %v505 = vmul.f32 %v489, %v489
        %v506 = vmul.f32 %v490, %v490
        %v507 = vmul.f32 %v491, %v491
        %v508 = vmul.f32 %v500, %v484
        %v509 = vmul.f32 %v501, %v485
        %v510 = vmul.f32 %v502, %v486
        %v511 = vmul.f32 %v503, %v487
        %v512 = vmul.f32 %v504, %v488
        %v513 = vmul.f32 %v505, %v489
        %v514 = vmul.f32 %v506, %v490
        %v515 = vmul.f32 %v507, %v491
        %v516 = vmul.f32 %v508, 0.044715
        %v517 = vmul.f32 %v509, 0.044715
        %v518 = vmul.f32 %v510, 0.044715
        %v519 = vmul.f32 %v511, 0.044715
        %v520 = vmul.f32 %v512, 0.044715
        %v521 = vmul.f32 %v513, 0.044715
        %v522 = vmul.f32 %v514, 0.044715
        %v523 = vmul.f32 %v515, 0.044715
        %v524 = vadd.f32 %v484, %v516
        %v525 = vadd.f32 %v485, %v517
        %v526 = vadd.f32 %v486, %v518
        %v527 = vadd.f32 %v487, %v519
        %v528 = vadd.f32 %v488, %v520
        %v529 = vadd.f32 %v489, %v521
        %v530 = vadd.f32 %v490, %v522
        %v531 = vadd.f32 %v491, %v523
        %v532 = vmul.f32 %v524, 0.7978846
        %v533 = vmul.f32 %v525, 0.7978846
        %v534 = vmul.f32 %v526, 0.7978846
        %v535 = vmul.f32 %v527, 0.7978846
        %v536 = vmul.f32 %v528, 0.7978846
        %v537 = vmul.f32 %v529, 0.7978846
        %v538 = vmul.f32 %v530, 0.7978846
        %v539 = vmul.f32 %v531, 0.7978846
        %v540 = vtanh.pop %v532
        %v541 = vtanh.pop %v533
        %v542 = vtanh.pop %v534
        %v543 = vtanh.pop %v535
        %v544 = vtanh.pop %v536
        %v545 = vtanh.pop %v537
        %v546 = vtanh.pop %v538
        %v547 = vtanh.pop %v539
        %v548 = vadd.f32 %v540, 1.0
        %v549 = vadd.f32 %v541, 1.0
        %v550 = vadd.f32 %v542, 1.0
        %v551 = vadd.f32 %v543, 1.0
        %v552 = vadd.f32 %v544, 1.0
        %v553 = vadd.f32 %v545, 1.0
        %v554 = vadd.f32 %v546, 1.0
        %v555 = vadd.f32 %v547, 1.0
        %v556 = vmul.f32 %v492, %v548
        %v557 = vmul.f32 %v493, %v549
        %v558 = vmul.f32 %v494, %v550
        %v559 = vmul.f32 %v495, %v551
        %v560 = vmul.f32 %v496, %v552
        %v561 = vmul.f32 %v497, %v553
        %v562 = vmul.f32 %v498, %v554
        %v563 = vmul.f32 %v499, %v555
        %564 = vst [vmem:[%s188] sm:$0xff] %v556
        %565 = vst [vmem:[%s188 + $0x8] sm:$0xff] %v557
        %566 = vst [vmem:[%s188 + $0x10] sm:$0xff] %v558
        %567 = vst [vmem:[%s188 + $0x18] sm:$0xff] %v559
        %568 = vst [vmem:[%s188 + $0x20] sm:$0xff] %v560
        %569 = vst [vmem:[%s188 + $0x28] sm:$0xff] %v561
        %570 = vst [vmem:[%s188 + $0x30] sm:$0xff] %v562
        %571 = vst [vmem:[%s188 + $0x38] sm:$0xff] %v563
        %s572 = sand.u32 %s109, 1
        %s573 = scalar_lea.sflag [#allocation3], %s572
        %s574 = sand.u32 %s109, 1
        %s575 = smul.addr %s574, 64
        %s576 = scalar_lea.vmem [#allocation2], %s575
        // Predicated region
        $region33: #{tpu_custom_call.1} parent=31 // pred_check
          %p577 = pneg %p119
        $region34: #{tpu_custom_call.1} parent=31 // pred_check_branch
          %579 = sbr.rel (%p577) target = $region36
        $region35: #{tpu_custom_call.1} parent=31 // pred_region
          %s580 = smul.u32 8, %s22
          %s582 = ssub.s32 1024, 1024
          %583 = vsyncadd %s573, %s582
          %s584 = smul.addr %s21, 8
          %s585 = sadd.s32 %s580, %s584
          %s586 = smul.addr %s585, 128
          %s587 = scalar_lea.hbm %s3, %s586
          %s589 = sshll.u32 %s576, 4
          %s590 = int_to_ptr.vmem [resolvable:$true] %s589
          %592 = dma.vmem_to_hbm [thread:$0]  %s590, 1024, %s587, %s573
        $region36: #{tpu_custom_call.1} parent=31 // pred_fallthru
          _
      $region32: #{tpu_custom_call.1} parent=5 // pred_fallthru
        _
      %p593 = scmp.le.s32.totalorder 2, %s12
      // Predicated region
      $region37: #{tpu_custom_call.1} parent=5 // pred_check
        %p594 = pneg %p593
      $region38: #{tpu_custom_call.1} parent=5 // pred_check_branch
        %596 = sbr.rel (%p594) target = $region40
      $region39: #{tpu_custom_call.1} parent=5 // pred_region
        %s597 = ssub.s32 %s12, 2
        // Predicated region
        $region41: #{tpu_custom_call.1} parent=39 // pred_check
          %p598 = pneg %p125
        $region42: #{tpu_custom_call.1} parent=39 // pred_check_branch
          %600 = sbr.rel (%p598) target = $region44
        $region43: #{tpu_custom_call.1} parent=39 // pred_region
          %s601 = sand.u32 %s110, 1
          %s602 = scalar_lea.sflag [#allocation3], %s601
          %s603 = sand.u32 %s110, 1
          %s604 = smul.addr %s603, 64
          %s605 = scalar_lea.vmem [#allocation2], %s604
          %606 = dma.done %s602, 1024
        $region44: #{tpu_custom_call.1} parent=39 // pred_fallthru
          _
      $region40: #{tpu_custom_call.1} parent=5 // pred_fallthru
        _
    $region6: #{tpu_custom_call.1} parent=1 // loop_footer
      %s16 = sadd.s32 1, %s12
    $region7: #{tpu_custom_call.1} parent=1 // loop_footer_branch
      %11 = sbr.rel target = $region3
    $region8: #{tpu_custom_call.1} parent=1 // loop_exit
      _
    %607 = vsyncpa [#allocation3], 1
    %s608 = scalar_lea.sflag [#allocation3], 1
    %609 = vsyncpa %s608, 1

</llo_original>
